<compile_context>
chip_gen: v7x
topology: tpu7x:2x2x1
jax: 0.10.0
libtpu: 0.0.40
codegen_flags: <defaults>
</compile_context>

<pallas_src>
import functools

import jax
import jax.numpy as jnp
from jax import lax
from jax.experimental import pallas as pl
from jax.experimental.pallas import tpu as pltpu

_MIB = 1024 * 1024

# Neighbor (dy, dx) offsets matching PyTorch kernel channels 0..7:
#   ch0:(0,0) ch1:(0,1) ch2:(0,2) ch3:(1,0) ch4:(1,2) ch5:(2,0) ch6:(2,1) ch7:(2,2)
# (kernel-tap position (ky, kx) -> offset (ky-1, kx-1))
_OFFSETS = ((-1, -1), (-1, 0), (-1, 1),
            (0, -1),           (0, 1),
            (1, -1),  (1, 0),  (1, 1))


def _shift_replicate(x, off, axis):
    """y[..., i, ...] = x[..., clamp(i + off, 0, n-1), ...] along `axis`.

    `off` is a static Python int; implements replicate ('edge') padding
    followed by a shifted slice (static slices + concatenate, which Mosaic
    lowers for both the sublane and lane axes).
    """
    if off == 0:
        return x
    n = x.shape[axis]
    d = abs(off)
    if d >= n:  # every output element clamps to the edge
        idx = 0 if off < 0 else n - 1
        edge = lax.slice_in_dim(x, idx, idx + 1, axis=axis)
        return jnp.concatenate([edge] * n, axis=axis)
    if off < 0:
        edge = lax.slice_in_dim(x, 0, 1, axis=axis)
        body = lax.slice_in_dim(x, 0, n - d, axis=axis)
        pieces = [edge] * d + [body]
    else:
        edge = lax.slice_in_dim(x, n - 1, n, axis=axis)
        body = lax.slice_in_dim(x, d, n, axis=axis)
        pieces = [body] + [edge] * d
    return jnp.concatenate(pieces, axis=axis)


def _local_affinity_kernel(x_ref, o_ref, *, dilations):
    # x_ref: (T, H, W)    o_ref: (T, 8 * len(dilations), H, W)
    x = x_ref[...]  # load the whole tile once; all T slabs processed together
    out_ch = 0
    for d in dilations:
        # Hoist the two W-axis (lane) shifts; the 8 offsets reuse them and add
        # at most one H-axis (sublane) shift each -> 2 lane + 6 sublane shifts
        # per dilation (lane rotates are the heavier XLU path on v6e/v7x).
        cols = {
            -1: _shift_replicate(x, -d, axis=2),
            0: x,
            1: _shift_replicate(x, d, axis=2),
        }
        for dy, dx in _OFFSETS:
            nb = cols[dx]
            if dy != 0:
                nb = _shift_replicate(nb, dy * d, axis=1)
            o_ref[:, out_ch, :, :] = x - nb
            out_ch += 1


def _round_up(v, m):
    return ((v + m - 1) // m) * m


def _sublane_granule(itemsize):
    # 32-bit tiles are (8,128); 16-bit packs 2/sublane -> 16; 8-bit -> 32.
    return max(8, 32 // max(1, int(itemsize)))


def _vmem_capacity_bytes():
    """Per-core VMEM capacity (128 MiB v5e/v6e, 64 MiB v7x); conservative fallback."""
    try:
        info = pltpu.get_tpu_info()
        cap = getattr(info, "vmem_capacity_bytes", None)
        if cap:
            return int(cap)
    except Exception:
        pass
    return 64 * _MIB  # v7x per-TensorCore VMEM: a safe lower bound for all generations


def _pick_batch_block(bk, in_slab_bytes, out_slab_bytes, target_out_bytes,
                      vmem_budget_bytes, min_steps=4):
    """Pick the per-step slab count T and the grid length.

    T is capped by (a) the generation-aware output-block byte target, (b) the
    double-buffered VMEM budget computed from PADDED-layout bytes, and (c) a
    minimum of `min_steps` grid steps (2 per v7x TensorCore) so the writeback
    DMA stays pipelined.  Prefers an exact divisor of bk close to the cap (no
    ragged boundary block); otherwise uses grid = cdiv(bk, T) and lets Pallas
    clip the last block instead of degrading to 1-slab steps.
    """
    t = max(1, target_out_bytes // max(1, out_slab_bytes))
    t = min(t, max(1, vmem_budget_bytes // max(1, 2 * (in_slab_bytes + out_slab_bytes))))
    if bk >= min_steps:
        t = min(t, bk // min_steps)
    t = int(max(1, min(t, bk)))
    for cand in range(t, max(1, (2 * t) // 3) - 1, -1):
        if bk % cand == 0:
            return cand, bk // cand          # exact grid, no boundary block
    return t, pl.cdiv(bk, t)                 # ragged last block, clipped by Pallas


def local_affinity(x, dilations=(1,)):
    """Pallas implementation of LocalAffinity.forward.

    x: (B, K, H, W) float array.
    returns: (B, K, 8 * len(dilations), H, W), same dtype as x.
    """
    dilations = tuple(int(d) for d in dilations)
    B, K, H, W = x.shape
    n_out = 8 * len(dilations)
    bk = B * K
    itemsize = jnp.dtype(x.dtype).itemsize

    # ---- generation-aware sizing -------------------------------------------
    vmem_cap = _vmem_capacity_bytes()                          # 128 MiB v5e/v6e, 64 MiB v7x
    vmem_limit = min(64 * _MIB, (vmem_cap * 7) // 10)          # 64 MiB v5e/v6e, ~45 MiB v7x
    target_out = min(16 * _MIB, max(4 * _MIB, vmem_cap // 8))  # 16 MiB v5e/v6e, 8 MiB v7x
    vmem_budget = max(8 * _MIB, vmem_limit - 4 * _MIB)         # slack for spills / scratch

    # (sublane,128)-padded per-slab footprints: for W < 128 the real VMEM block
    # is up to 8x the logical bytes, so sizing from logical bytes can silently
    # blow past vmem_limit (worst on v7x's 64 MiB VMEM).
    sub = _sublane_granule(itemsize)
    hw_pad = _round_up(H, sub) * _round_up(W, 128)
    in_slab = hw_pad * itemsize
    out_slab = n_out * hw_pad * itemsize

    T, steps = _pick_batch_block(bk, in_slab, out_slab, target_out, vmem_budget)

    xf = x.reshape(bk, H, W)
    kernel = functools.partial(_local_affinity_kernel, dilations=dilations)
    cost = pl.CostEstimate(
        flops=n_out * bk * H * W,                                # one sub per output elem
        transcendentals=0,
        bytes_accessed=(1 + n_out) * bk * H * W * itemsize,      # read x once, write 8D outputs
    )

    out = pl.pallas_call(
        kernel,
        out_shape=jax.ShapeDtypeStruct((bk, n_out, H, W), x.dtype),
        grid=(steps,),
        in_specs=[pl.BlockSpec((T, H, W), lambda i: (i, 0, 0))],
        out_specs=pl.BlockSpec((T, n_out, H, W), lambda i: (i, 0, 0, 0)),
        compiler_params=pltpu.CompilerParams(
            dimension_semantics=("parallel",),
            vmem_limit_bytes=int(vmem_limit),
        ),
        cost_estimate=cost,
    )(xf)
    return out.reshape(B, K, n_out, H, W)


def _reference_local_affinity(x, dilations=(1,)):
    """Pure-JAX reference (mirrors F.pad(replicate) + conv2d with the fixed kernel)."""
    B, K, H, W = x.shape
    outs = []
    for d in dilations:
        xp = jnp.pad(x, ((0, 0), (0, 0), (d, d), (d, d)), mode="edge")
        for dy, dx in _OFFSETS:
            ky, kx = dy + 1, dx + 1
            nb = xp[:, :, ky * d:ky * d + H, kx * d:kx * d + W]
            outs.append(x - nb)
    return jnp.stack(outs, axis=2)


if __name__ == "__main__":
    key = jax.random.PRNGKey(0)
    B, K, H, W = 2, 4, 16, 16
    dilations = (1, 2)

    x = jax.random.normal(key, (B, K, H, W), dtype=jnp.float32)

    out = jax.block_until_ready(local_affinity(x, dilations))

    ref = _reference_local_affinity(x, dilations)
    assert out.shape == (B, K, 8 * len(dilations), H, W), out.shape
    assert jnp.allclose(out, ref, atol=1e-6), "mismatch vs reference"

    print("KERNEL_OK")
</pallas_src>

<mosaic_0001>
module attributes {stable_mosaic.version = 11 : i64} {
  func.func @_local_affinity_kernel(%arg0: i32, %arg1: memref<2x16x16xf32, #tpu.memory_space<vmem>>, %arg2: memref<2x16x16x16xf32, #tpu.memory_space<vmem>>) attributes {dimension_semantics = [#tpu.dimension_semantics<parallel>], iteration_bounds = array<i64: 4>, scalar_prefetch = 0 : i64, scratch_operands = 0 : i64, tpu.core_type = #tpu.core_type<tc>, window_params = [{transform_indices = @transform_0, window_bounds = array<i64: 2, 16, 16>}, {transform_indices = @transform_1, window_bounds = array<i64: 2, 16, 16, 16>}]} {
    %c0 = arith.constant 0 : index
    %c0_0 = arith.constant 0 : index
    %c0_1 = arith.constant 0 : index
    %0 = vector.load %arg1[%c0, %c0_0, %c0_1] : memref<2x16x16xf32, #tpu.memory_space<vmem>>, vector<2x16x16xf32>
    %1 = vector.extract_strided_slice %0 {offsets = [0, 0, 0], sizes = [2, 16, 1], strides = [1, 1, 1]} : vector<2x16x16xf32> to vector<2x16x1xf32>
    %2 = vector.extract_strided_slice %0 {offsets = [0, 0, 0], sizes = [2, 16, 15], strides = [1, 1, 1]} : vector<2x16x16xf32> to vector<2x16x15xf32>
    %3 = tpu.concatenate %1, %2 in 2 : vector<2x16x1xf32>, vector<2x16x15xf32> -> vector<2x16x16xf32>
    %4 = vector.extract_strided_slice %0 {offsets = [0, 0, 15], sizes = [2, 16, 1], strides = [1, 1, 1]} : vector<2x16x16xf32> to vector<2x16x1xf32>
    %5 = vector.extract_strided_slice %0 {offsets = [0, 0, 1], sizes = [2, 16, 15], strides = [1, 1, 1]} : vector<2x16x16xf32> to vector<2x16x15xf32>
    %6 = tpu.concatenate %5, %4 in 2 : vector<2x16x15xf32>, vector<2x16x1xf32> -> vector<2x16x16xf32>
    %7 = vector.extract_strided_slice %3 {offsets = [0, 0, 0], sizes = [2, 1, 16], strides = [1, 1, 1]} : vector<2x16x16xf32> to vector<2x1x16xf32>
    %8 = vector.extract_strided_slice %3 {offsets = [0, 0, 0], sizes = [2, 15, 16], strides = [1, 1, 1]} : vector<2x16x16xf32> to vector<2x15x16xf32>
    %9 = tpu.concatenate %7, %8 in 1 : vector<2x1x16xf32>, vector<2x15x16xf32> -> vector<2x16x16xf32>
    %10 = arith.subf %0, %9 : vector<2x16x16xf32>
    %c0_2 = arith.constant 0 : index
    %c0_3 = arith.constant 0 : index
    %c0_4 = arith.constant 0 : index
    %c0_5 = arith.constant 0 : index
    %11 = vector.load %arg2[%c0_2, %c0_3, %c0_4, %c0_5] : memref<2x16x16x16xf32, #tpu.memory_space<vmem>>, vector<2x1x16x16xf32>
    %12 = vector.shape_cast %11 : vector<2x1x16x16xf32> to vector<2x16x16xf32>
    %13 = vector.shape_cast %10 : vector<2x16x16xf32> to vector<2x1x16x16xf32>
    tpu.vector_store %arg2[%c0_2, %c0_3, %c0_4, %c0_5], %13 {strides = array<i32>} : memref<2x16x16x16xf32, #tpu.memory_space<vmem>>, vector<2x1x16x16xf32>,
    %14 = vector.extract_strided_slice %0 {offsets = [0, 0, 0], sizes = [2, 1, 16], strides = [1, 1, 1]} : vector<2x16x16xf32> to vector<2x1x16xf32>
    %15 = vector.extract_strided_slice %0 {offsets = [0, 0, 0], sizes = [2, 15, 16], strides = [1, 1, 1]} : vector<2x16x16xf32> to vector<2x15x16xf32>
    %16 = tpu.concatenate %14, %15 in 1 : vector<2x1x16xf32>, vector<2x15x16xf32> -> vector<2x16x16xf32>
    %17 = arith.subf %0, %16 : vector<2x16x16xf32>
    %c0_6 = arith.constant 0 : index
    %c1 = arith.constant 1 : index
    %c0_7 = arith.constant 0 : index
    %c0_8 = arith.constant 0 : index
    %18 = vector.load %arg2[%c0_6, %c1, %c0_7, %c0_8] : memref<2x16x16x16xf32, #tpu.memory_space<vmem>>, vector<2x1x16x16xf32>
    %19 = vector.shape_cast %18 : vector<2x1x16x16xf32> to vector<2x16x16xf32>
    %20 = vector.shape_cast %17 : vector<2x16x16xf32> to vector<2x1x16x16xf32>
    tpu.vector_store %arg2[%c0_6, %c1, %c0_7, %c0_8], %20 {strides = array<i32>} : memref<2x16x16x16xf32, #tpu.memory_space<vmem>>, vector<2x1x16x16xf32>,
    %21 = vector.extract_strided_slice %6 {offsets = [0, 0, 0], sizes = [2, 1, 16], strides = [1, 1, 1]} : vector<2x16x16xf32> to vector<2x1x16xf32>
    %22 = vector.extract_strided_slice %6 {offsets = [0, 0, 0], sizes = [2, 15, 16], strides = [1, 1, 1]} : vector<2x16x16xf32> to vector<2x15x16xf32>
    %23 = tpu.concatenate %21, %22 in 1 : vector<2x1x16xf32>, vector<2x15x16xf32> -> vector<2x16x16xf32>
    %24 = arith.subf %0, %23 : vector<2x16x16xf32>
    %c0_9 = arith.constant 0 : index
    %c2 = arith.constant 2 : index
    %c0_10 = arith.constant 0 : index
    %c0_11 = arith.constant 0 : index
    %25 = vector.load %arg2[%c0_9, %c2, %c0_10, %c0_11] : memref<2x16x16x16xf32, #tpu.memory_space<vmem>>, vector<2x1x16x16xf32>
    %26 = vector.shape_cast %25 : vector<2x1x16x16xf32> to vector<2x16x16xf32>
    %27 = vector.shape_cast %24 : vector<2x16x16xf32> to vector<2x1x16x16xf32>
    tpu.vector_store %arg2[%c0_9, %c2, %c0_10, %c0_11], %27 {strides = array<i32>} : memref<2x16x16x16xf32, #tpu.memory_space<vmem>>, vector<2x1x16x16xf32>,
    %28 = arith.subf %0, %3 : vector<2x16x16xf32>
    %c0_12 = arith.constant 0 : index
    %c3 = arith.constant 3 : index
    %c0_13 = arith.constant 0 : index
    %c0_14 = arith.constant 0 : index
    %29 = vector.load %arg2[%c0_12, %c3, %c0_13, %c0_14] : memref<2x16x16x16xf32, #tpu.memory_space<vmem>>, vector<2x1x16x16xf32>
    %30 = vector.shape_cast %29 : vector<2x1x16x16xf32> to vector<2x16x16xf32>
    %31 = vector.shape_cast %28 : vector<2x16x16xf32> to vector<2x1x16x16xf32>
    tpu.vector_store %arg2[%c0_12, %c3, %c0_13, %c0_14], %31 {strides = array<i32>} : memref<2x16x16x16xf32, #tpu.memory_space<vmem>>, vector<2x1x16x16xf32>,
    %32 = arith.subf %0, %6 : vector<2x16x16xf32>
    %c0_15 = arith.constant 0 : index
    %c4 = arith.constant 4 : index
    %c0_16 = arith.constant 0 : index
    %c0_17 = arith.constant 0 : index
    %33 = vector.load %arg2[%c0_15, %c4, %c0_16, %c0_17] : memref<2x16x16x16xf32, #tpu.memory_space<vmem>>, vector<2x1x16x16xf32>
    %34 = vector.shape_cast %33 : vector<2x1x16x16xf32> to vector<2x16x16xf32>
    %35 = vector.shape_cast %32 : vector<2x16x16xf32> to vector<2x1x16x16xf32>
    tpu.vector_store %arg2[%c0_15, %c4, %c0_16, %c0_17], %35 {strides = array<i32>} : memref<2x16x16x16xf32, #tpu.memory_space<vmem>>, vector<2x1x16x16xf32>,
    %36 = vector.extract_strided_slice %3 {offsets = [0, 15, 0], sizes = [2, 1, 16], strides = [1, 1, 1]} : vector<2x16x16xf32> to vector<2x1x16xf32>
    %37 = vector.extract_strided_slice %3 {offsets = [0, 1, 0], sizes = [2, 15, 16], strides = [1, 1, 1]} : vector<2x16x16xf32> to vector<2x15x16xf32>
    %38 = tpu.concatenate %37, %36 in 1 : vector<2x15x16xf32>, vector<2x1x16xf32> -> vector<2x16x16xf32>
    %39 = arith.subf %0, %38 : vector<2x16x16xf32>
    %c0_18 = arith.constant 0 : index
    %c5 = arith.constant 5 : index
    %c0_19 = arith.constant 0 : index
    %c0_20 = arith.constant 0 : index
    %40 = vector.load %arg2[%c0_18, %c5, %c0_19, %c0_20] : memref<2x16x16x16xf32, #tpu.memory_space<vmem>>, vector<2x1x16x16xf32>
    %41 = vector.shape_cast %40 : vector<2x1x16x16xf32> to vector<2x16x16xf32>
    %42 = vector.shape_cast %39 : vector<2x16x16xf32> to vector<2x1x16x16xf32>
    tpu.vector_store %arg2[%c0_18, %c5, %c0_19, %c0_20], %42 {strides = array<i32>} : memref<2x16x16x16xf32, #tpu.memory_space<vmem>>, vector<2x1x16x16xf32>,
    %43 = vector.extract_strided_slice %0 {offsets = [0, 15, 0], sizes = [2, 1, 16], strides = [1, 1, 1]} : vector<2x16x16xf32> to vector<2x1x16xf32>
    %44 = vector.extract_strided_slice %0 {offsets = [0, 1, 0], sizes = [2, 15, 16], strides = [1, 1, 1]} : vector<2x16x16xf32> to vector<2x15x16xf32>
    %45 = tpu.concatenate %44, %43 in 1 : vector<2x15x16xf32>, vector<2x1x16xf32> -> vector<2x16x16xf32>
    %46 = arith.subf %0, %45 : vector<2x16x16xf32>
    %c0_21 = arith.constant 0 : index
    %c6 = arith.constant 6 : index
    %c0_22 = arith.constant 0 : index
    %c0_23 = arith.constant 0 : index
    %47 = vector.load %arg2[%c0_21, %c6, %c0_22, %c0_23] : memref<2x16x16x16xf32, #tpu.memory_space<vmem>>, vector<2x1x16x16xf32>
    %48 = vector.shape_cast %47 : vector<2x1x16x16xf32> to vector<2x16x16xf32>
    %49 = vector.shape_cast %46 : vector<2x16x16xf32> to vector<2x1x16x16xf32>
    tpu.vector_store %arg2[%c0_21, %c6, %c0_22, %c0_23], %49 {strides = array<i32>} : memref<2x16x16x16xf32, #tpu.memory_space<vmem>>, vector<2x1x16x16xf32>,
    %50 = vector.extract_strided_slice %6 {offsets = [0, 15, 0], sizes = [2, 1, 16], strides = [1, 1, 1]} : vector<2x16x16xf32> to vector<2x1x16xf32>
    %51 = vector.extract_strided_slice %6 {offsets = [0, 1, 0], sizes = [2, 15, 16], strides = [1, 1, 1]} : vector<2x16x16xf32> to vector<2x15x16xf32>
    %52 = tpu.concatenate %51, %50 in 1 : vector<2x15x16xf32>, vector<2x1x16xf32> -> vector<2x16x16xf32>
    %53 = arith.subf %0, %52 : vector<2x16x16xf32>
    %c0_24 = arith.constant 0 : index
    %c7 = arith.constant 7 : index
    %c0_25 = arith.constant 0 : index
    %c0_26 = arith.constant 0 : index
    %54 = vector.load %arg2[%c0_24, %c7, %c0_25, %c0_26] : memref<2x16x16x16xf32, #tpu.memory_space<vmem>>, vector<2x1x16x16xf32>
    %55 = vector.shape_cast %54 : vector<2x1x16x16xf32> to vector<2x16x16xf32>
    %56 = vector.shape_cast %53 : vector<2x16x16xf32> to vector<2x1x16x16xf32>
    tpu.vector_store %arg2[%c0_24, %c7, %c0_25, %c0_26], %56 {strides = array<i32>} : memref<2x16x16x16xf32, #tpu.memory_space<vmem>>, vector<2x1x16x16xf32>,
    %57 = vector.extract_strided_slice %0 {offsets = [0, 0, 0], sizes = [2, 16, 1], strides = [1, 1, 1]} : vector<2x16x16xf32> to vector<2x16x1xf32>
    %58 = vector.extract_strided_slice %0 {offsets = [0, 0, 0], sizes = [2, 16, 14], strides = [1, 1, 1]} : vector<2x16x16xf32> to vector<2x16x14xf32>
    %59 = tpu.concatenate %57, %57, %58 in 2 : vector<2x16x1xf32>, vector<2x16x1xf32>, vector<2x16x14xf32> -> vector<2x16x16xf32>
    %60 = vector.extract_strided_slice %0 {offsets = [0, 0, 15], sizes = [2, 16, 1], strides = [1, 1, 1]} : vector<2x16x16xf32> to vector<2x16x1xf32>
    %61 = vector.extract_strided_slice %0 {offsets = [0, 0, 2], sizes = [2, 16, 14], strides = [1, 1, 1]} : vector<2x16x16xf32> to vector<2x16x14xf32>
    %62 = tpu.concatenate %61, %60, %60 in 2 : vector<2x16x14xf32>, vector<2x16x1xf32>, vector<2x16x1xf32> -> vector<2x16x16xf32>
    %63 = vector.extract_strided_slice %59 {offsets = [0, 0, 0], sizes = [2, 1, 16], strides = [1, 1, 1]} : vector<2x16x16xf32> to vector<2x1x16xf32>
    %64 = vector.extract_strided_slice %59 {offsets = [0, 0, 0], sizes = [2, 14, 16], strides = [1, 1, 1]} : vector<2x16x16xf32> to vector<2x14x16xf32>
    %65 = tpu.concatenate %63, %63, %64 in 1 : vector<2x1x16xf32>, vector<2x1x16xf32>, vector<2x14x16xf32> -> vector<2x16x16xf32>
    %66 = arith.subf %0, %65 : vector<2x16x16xf32>
    %c0_27 = arith.constant 0 : index
    %c8 = arith.constant 8 : index
    %c0_28 = arith.constant 0 : index
    %c0_29 = arith.constant 0 : index
    %67 = vector.load %arg2[%c0_27, %c8, %c0_28, %c0_29] : memref<2x16x16x16xf32, #tpu.memory_space<vmem>>, vector<2x1x16x16xf32>
    %68 = vector.shape_cast %67 : vector<2x1x16x16xf32> to vector<2x16x16xf32>
    %69 = vector.shape_cast %66 : vector<2x16x16xf32> to vector<2x1x16x16xf32>
    tpu.vector_store %arg2[%c0_27, %c8, %c0_28, %c0_29], %69 {strides = array<i32>} : memref<2x16x16x16xf32, #tpu.memory_space<vmem>>, vector<2x1x16x16xf32>,
    %70 = vector.extract_strided_slice %0 {offsets = [0, 0, 0], sizes = [2, 1, 16], strides = [1, 1, 1]} : vector<2x16x16xf32> to vector<2x1x16xf32>
    %71 = vector.extract_strided_slice %0 {offsets = [0, 0, 0], sizes = [2, 14, 16], strides = [1, 1, 1]} : vector<2x16x16xf32> to vector<2x14x16xf32>
    %72 = tpu.concatenate %70, %70, %71 in 1 : vector<2x1x16xf32>, vector<2x1x16xf32>, vector<2x14x16xf32> -> vector<2x16x16xf32>
    %73 = arith.subf %0, %72 : vector<2x16x16xf32>
    %c0_30 = arith.constant 0 : index
    %c9 = arith.constant 9 : index
    %c0_31 = arith.constant 0 : index
    %c0_32 = arith.constant 0 : index
    %74 = vector.load %arg2[%c0_30, %c9, %c0_31, %c0_32] : memref<2x16x16x16xf32, #tpu.memory_space<vmem>>, vector<2x1x16x16xf32>
    %75 = vector.shape_cast %74 : vector<2x1x16x16xf32> to vector<2x16x16xf32>
    %76 = vector.shape_cast %73 : vector<2x16x16xf32> to vector<2x1x16x16xf32>
    tpu.vector_store %arg2[%c0_30, %c9, %c0_31, %c0_32], %76 {strides = array<i32>} : memref<2x16x16x16xf32, #tpu.memory_space<vmem>>, vector<2x1x16x16xf32>,
    %77 = vector.extract_strided_slice %62 {offsets = [0, 0, 0], sizes = [2, 1, 16], strides = [1, 1, 1]} : vector<2x16x16xf32> to vector<2x1x16xf32>
    %78 = vector.extract_strided_slice %62 {offsets = [0, 0, 0], sizes = [2, 14, 16], strides = [1, 1, 1]} : vector<2x16x16xf32> to vector<2x14x16xf32>
    %79 = tpu.concatenate %77, %77, %78 in 1 : vector<2x1x16xf32>, vector<2x1x16xf32>, vector<2x14x16xf32> -> vector<2x16x16xf32>
    %80 = arith.subf %0, %79 : vector<2x16x16xf32>
    %c0_33 = arith.constant 0 : index
    %c10 = arith.constant 10 : index
    %c0_34 = arith.constant 0 : index
    %c0_35 = arith.constant 0 : index
    %81 = vector.load %arg2[%c0_33, %c10, %c0_34, %c0_35] : memref<2x16x16x16xf32, #tpu.memory_space<vmem>>, vector<2x1x16x16xf32>
    %82 = vector.shape_cast %81 : vector<2x1x16x16xf32> to vector<2x16x16xf32>
    %83 = vector.shape_cast %80 : vector<2x16x16xf32> to vector<2x1x16x16xf32>
    tpu.vector_store %arg2[%c0_33, %c10, %c0_34, %c0_35], %83 {strides = array<i32>} : memref<2x16x16x16xf32, #tpu.memory_space<vmem>>, vector<2x1x16x16xf32>,
    %84 = arith.subf %0, %59 : vector<2x16x16xf32>
    %c0_36 = arith.constant 0 : index
    %c11 = arith.constant 11 : index
    %c0_37 = arith.constant 0 : index
    %c0_38 = arith.constant 0 : index
    %85 = vector.load %arg2[%c0_36, %c11, %c0_37, %c0_38] : memref<2x16x16x16xf32, #tpu.memory_space<vmem>>, vector<2x1x16x16xf32>
    %86 = vector.shape_cast %85 : vector<2x1x16x16xf32> to vector<2x16x16xf32>
    %87 = vector.shape_cast %84 : vector<2x16x16xf32> to vector<2x1x16x16xf32>
    tpu.vector_store %arg2[%c0_36, %c11, %c0_37, %c0_38], %87 {strides = array<i32>} : memref<2x16x16x16xf32, #tpu.memory_space<vmem>>, vector<2x1x16x16xf32>,
    %88 = arith.subf %0, %62 : vector<2x16x16xf32>
    %c0_39 = arith.constant 0 : index
    %c12 = arith.constant 12 : index
    %c0_40 = arith.constant 0 : index
    %c0_41 = arith.constant 0 : index
    %89 = vector.load %arg2[%c0_39, %c12, %c0_40, %c0_41] : memref<2x16x16x16xf32, #tpu.memory_space<vmem>>, vector<2x1x16x16xf32>
    %90 = vector.shape_cast %89 : vector<2x1x16x16xf32> to vector<2x16x16xf32>
    %91 = vector.shape_cast %88 : vector<2x16x16xf32> to vector<2x1x16x16xf32>
    tpu.vector_store %arg2[%c0_39, %c12, %c0_40, %c0_41], %91 {strides = array<i32>} : memref<2x16x16x16xf32, #tpu.memory_space<vmem>>, vector<2x1x16x16xf32>,
    %92 = vector.extract_strided_slice %59 {offsets = [0, 15, 0], sizes = [2, 1, 16], strides = [1, 1, 1]} : vector<2x16x16xf32> to vector<2x1x16xf32>
    %93 = vector.extract_strided_slice %59 {offsets = [0, 2, 0], sizes = [2, 14, 16], strides = [1, 1, 1]} : vector<2x16x16xf32> to vector<2x14x16xf32>
    %94 = tpu.concatenate %93, %92, %92 in 1 : vector<2x14x16xf32>, vector<2x1x16xf32>, vector<2x1x16xf32> -> vector<2x16x16xf32>
    %95 = arith.subf %0, %94 : vector<2x16x16xf32>
    %c0_42 = arith.constant 0 : index
    %c13 = arith.constant 13 : index
    %c0_43 = arith.constant 0 : index
    %c0_44 = arith.constant 0 : index
    %96 = vector.load %arg2[%c0_42, %c13, %c0_43, %c0_44] : memref<2x16x16x16xf32, #tpu.memory_space<vmem>>, vector<2x1x16x16xf32>
    %97 = vector.shape_cast %96 : vector<2x1x16x16xf32> to vector<2x16x16xf32>
    %98 = vector.shape_cast %95 : vector<2x16x16xf32> to vector<2x1x16x16xf32>
    tpu.vector_store %arg2[%c0_42, %c13, %c0_43, %c0_44], %98 {strides = array<i32>} : memref<2x16x16x16xf32, #tpu.memory_space<vmem>>, vector<2x1x16x16xf32>,
    %99 = vector.extract_strided_slice %0 {offsets = [0, 15, 0], sizes = [2, 1, 16], strides = [1, 1, 1]} : vector<2x16x16xf32> to vector<2x1x16xf32>
    %100 = vector.extract_strided_slice %0 {offsets = [0, 2, 0], sizes = [2, 14, 16], strides = [1, 1, 1]} : vector<2x16x16xf32> to vector<2x14x16xf32>
    %101 = tpu.concatenate %100, %99, %99 in 1 : vector<2x14x16xf32>, vector<2x1x16xf32>, vector<2x1x16xf32> -> vector<2x16x16xf32>
    %102 = arith.subf %0, %101 : vector<2x16x16xf32>
    %c0_45 = arith.constant 0 : index
    %c14 = arith.constant 14 : index
    %c0_46 = arith.constant 0 : index
    %c0_47 = arith.constant 0 : index
    %103 = vector.load %arg2[%c0_45, %c14, %c0_46, %c0_47] : memref<2x16x16x16xf32, #tpu.memory_space<vmem>>, vector<2x1x16x16xf32>
    %104 = vector.shape_cast %103 : vector<2x1x16x16xf32> to vector<2x16x16xf32>
    %105 = vector.shape_cast %102 : vector<2x16x16xf32> to vector<2x1x16x16xf32>
    tpu.vector_store %arg2[%c0_45, %c14, %c0_46, %c0_47], %105 {strides = array<i32>} : memref<2x16x16x16xf32, #tpu.memory_space<vmem>>, vector<2x1x16x16xf32>,
    %106 = vector.extract_strided_slice %62 {offsets = [0, 15, 0], sizes = [2, 1, 16], strides = [1, 1, 1]} : vector<2x16x16xf32> to vector<2x1x16xf32>
    %107 = vector.extract_strided_slice %62 {offsets = [0, 2, 0], sizes = [2, 14, 16], strides = [1, 1, 1]} : vector<2x16x16xf32> to vector<2x14x16xf32>
    %108 = tpu.concatenate %107, %106, %106 in 1 : vector<2x14x16xf32>, vector<2x1x16xf32>, vector<2x1x16xf32> -> vector<2x16x16xf32>
    %109 = arith.subf %0, %108 : vector<2x16x16xf32>
    %c0_48 = arith.constant 0 : index
    %c15 = arith.constant 15 : index
    %c0_49 = arith.constant 0 : index
    %c0_50 = arith.constant 0 : index
    %110 = vector.load %arg2[%c0_48, %c15, %c0_49, %c0_50] : memref<2x16x16x16xf32, #tpu.memory_space<vmem>>, vector<2x1x16x16xf32>
    %111 = vector.shape_cast %110 : vector<2x1x16x16xf32> to vector<2x16x16xf32>
    %112 = vector.shape_cast %109 : vector<2x16x16xf32> to vector<2x1x16x16xf32>
    tpu.vector_store %arg2[%c0_48, %c15, %c0_49, %c0_50], %112 {strides = array<i32>} : memref<2x16x16x16xf32, #tpu.memory_space<vmem>>, vector<2x1x16x16xf32>,
    return
  }
  func.func @transform_0(%arg0: i32) -> (i32, i32, i32) {
    %c0_i32 = arith.constant 0 : i32
    %c0_i32_0 = arith.constant 0 : i32
    %c0_i32_1 = arith.constant 0 : i32
    return %arg0, %c0_i32, %c0_i32_0 : i32, i32, i32
  }
  func.func @transform_1(%arg0: i32) -> (i32, i32, i32, i32) {
    %c0_i32 = arith.constant 0 : i32
    %c0_i32_0 = arith.constant 0 : i32
    %c0_i32_1 = arith.constant 0 : i32
    %c0_i32_2 = arith.constant 0 : i32
    return %arg0, %c0_i32, %c0_i32_0, %c0_i32_1 : i32, i32, i32, i32
  }
}

</mosaic_0001>

<llo_original>
// kernel: tpu_custom_call.1
$region0: #{tpu_custom_call.1}
  #allocation0 [shape = 'u32[]', space=smem, size = 0x4, offset = 0x4, fixed_abs, tag = 'smem constant byte address 0x4 - core index']
  #allocation1 [shape = 'u32[144,128]{1,0:T(1,128)}', space=vmem, size = 0x12000, scoped, tag = 'internal scratch']
  %s0 = inlined_call_operand.hbm [shape: f32[8,16,16], index: 0, kind: input, shape index: {}]
  %s1 = inlined_call_operand.hbm [shape: f32[8,16,16,16], index: 1, kind: output, shape index: {}]
  %s2 = sld [smem:[#allocation0]]
  $region41: #{tpu_custom_call.1} parent=0
    _
  %s4 = ssub.s32 1, %s2
  %s5 = scalar_select 0, %s4, %s2
  $region1: #{tpu_custom_call.1} parent=0
    #allocation2 [shape = 'u8[32768]{0}', space=vmem, size = 0x8000, scoped, tag = 'input window, operand 0']
    #allocation3 [shape = 's32[2]{0}', space=sflag, size = 0x8, scoped, tag = 'scoped memory for tpu_custom_call.1']
    #allocation4 [shape = 's32[2]{0}', space=sflag, size = 0x8, scoped, tag = 'scoped memory for tpu_custom_call.1']
    #allocation5 [shape = 'u8[524288]{0}', space=vmem, size = 0x80000, scoped, tag = 'output window, operand 0']
    %6 = vsyncpa [#allocation3], 0
    %s7 = scalar_lea.sflag [#allocation3], 1
    %8 = vsyncpa %s7, 0
    %9 = vsyncpa [#allocation4], 0
    %s10 = scalar_lea.sflag [#allocation4], 1
    %11 = vsyncpa %s10, 0
    loop: start=0, step=1, limit=6
    $region2: #{tpu_custom_call.1} parent=1 // loop_pre_header
      _
    $region3: #{tpu_custom_call.1} parent=1 // loop_header
      %s13 = sphi 0, %s17
      %p14 = scmp.ge.s32.totalorder %s13, 6
      %s23 = sphi 0, %s25
      %s26 = sphi 0, %s23
      %s27 = sphi 0, %s26
      %s43 = sphi 0, %s27
      %s49 = sphi 0, %s51
      %s52 = sphi 0, %s49
      %s53 = sphi 0, %s52
      %s69 = sphi 0, %s53
    $region4: #{tpu_custom_call.1} parent=1 // loop_header_branch
      %16 = sbr.rel (%p14) target = $region8
    $region5: #{tpu_custom_call.1} parent=1 // loop_body
      %s18 = ssub.s32 %s13, 1
      %s19 = ssub.s32 %s13, 2
      %s20 = sadd.s32 %s13, 1
      %s21 = ssub.s32 %s13, %s20
      %p22 = scmp.eq.s32.totalorder %s21, 0
      %s24 = sadd.s32 %s23, 1
      %s25 = scalar_select %p22, %s23, %s24
      %p28 = pneg %p22
      %p29 = scmp.eq.s32.totalorder %s13, 3
      %p30 = por %p28, %p29
      %p31 = scmp.ne.s32.totalorder %s23, %s26
      %p32 = scmp.eq.s32.totalorder %s13, 0
      %p33 = por %p31, %p32
      %p34 = scmp.ne.s32.totalorder %s23, %s26
      %p35 = scmp.eq.s32.totalorder %s18, 3
      %p36 = por %p34, %p35
      %p37 = scmp.ne.s32.totalorder %s26, %s27
      %p38 = scmp.eq.s32.totalorder %s18, 0
      %p39 = por %p37, %p38
      %p40 = scmp.ne.s32.totalorder %s26, %s27
      %p41 = scmp.eq.s32.totalorder %s19, 3
      %p42 = por %p40, %p41
      %p44 = scmp.ne.s32.totalorder %s27, %s43
      %p45 = scmp.eq.s32.totalorder %s19, 0
      %p46 = por %p44, %p45
      %s47 = ssub.s32 %s13, %s20
      %p48 = scmp.eq.s32.totalorder %s47, 0
      %s50 = sadd.s32 %s49, 1
      %s51 = scalar_select %p48, %s49, %s50
      %p54 = pneg %p48
      %p55 = scmp.eq.s32.totalorder %s13, 3
      %p56 = por %p54, %p55
      %p57 = scmp.ne.s32.totalorder %s49, %s52
      %p58 = scmp.eq.s32.totalorder %s13, 0
      %p59 = por %p57, %p58
      %p60 = scmp.ne.s32.totalorder %s49, %s52
      %p61 = scmp.eq.s32.totalorder %s18, 3
      %p62 = por %p60, %p61
      %p63 = scmp.ne.s32.totalorder %s52, %s53
      %p64 = scmp.eq.s32.totalorder %s18, 0
      %p65 = por %p63, %p64
      %p66 = scmp.ne.s32.totalorder %s52, %s53
      %p67 = scmp.eq.s32.totalorder %s19, 3
      %p68 = por %p66, %p67
      %p70 = scmp.ne.s32.totalorder %s53, %s69
      %p71 = scmp.eq.s32.totalorder %s19, 0
      %p72 = por %p70, %p71
      %p73 = scmp.le.s32.totalorder 1, %s13
      %p74 = scmp.lt.s32.totalorder %s13, 5
      %p75 = pnand %p73, %p74
      %p76 = pneg %p75
      // Predicated region
      $region9: #{tpu_custom_call.1} parent=5 // pred_check
        _
      $region10: #{tpu_custom_call.1} parent=5 // pred_check_branch
        %78 = sbr.rel (%p75) target = $region12
      $region11: #{tpu_custom_call.1} parent=5 // pred_region
        %s79 = ssub.s32 %s13, 1
      $region12: #{tpu_custom_call.1} parent=5 // pred_fallthru
        _
      %p80 = scmp.lt.s32.totalorder %s13, 4
      // Predicated region
      $region13: #{tpu_custom_call.1} parent=5 // pred_check
        %p81 = pneg %p80
      $region14: #{tpu_custom_call.1} parent=5 // pred_check_branch
        %83 = sbr.rel (%p81) target = $region16
      $region15: #{tpu_custom_call.1} parent=5 // pred_region
        // Predicated region
        $region17: #{tpu_custom_call.1} parent=15 // pred_check
          %p84 = pneg %p33
        $region18: #{tpu_custom_call.1} parent=15 // pred_check_branch
          %86 = sbr.rel (%p84) target = $region20
        $region19: #{tpu_custom_call.1} parent=15 // pred_region
          %s87 = sand.u32 %s23, 1
          %s88 = scalar_lea.sflag [#allocation3], %s87
          %s89 = sand.u32 %s23, 1
          %s90 = smul.addr %s89, 32
          %s91 = scalar_lea.vmem [#allocation2], %s90
          %s92 = smul.u32 2, %s13
          %s94 = ssub.s32 512, 512
          %95 = vsyncadd %s88, %s94
          %s96 = smul.addr %s92, 2
          %s97 = smul.addr %s96, 128
          %s98 = scalar_lea.hbm %s0, %s97
          %s99 = sshll.u32 %s91, 4
          %s100 = int_to_ptr.vmem [resolvable:$true] %s99
          %105 = dma.hbm_to_vmem [thread:$0]  %s98, 512, %s100, %s88, 128, 128, 8
        $region20: #{tpu_custom_call.1} parent=15 // pred_fallthru
          _
      $region16: #{tpu_custom_call.1} parent=5 // pred_fallthru
        _
      %p106 = scmp.le.s32.totalorder 1, %s13
      %p107 = scmp.lt.s32.totalorder %s13, 5
      %p108 = pnand %p106, %p107
      %p109 = pneg %p108
      // Predicated region
      $region21: #{tpu_custom_call.1} parent=5 // pred_check
        _
      $region22: #{tpu_custom_call.1} parent=5 // pred_check_branch
        %111 = sbr.rel (%p108) target = $region24
      $region23: #{tpu_custom_call.1} parent=5 // pred_region
        %s112 = ssub.s32 %s13, 1
        %s113 = sand.u32 %s26, 1
        %s114 = scalar_lea.sflag [#allocation3], %s113
        %s115 = sand.u32 %s26, 1
        %s116 = smul.addr %s115, 32
        %s117 = scalar_lea.vmem [#allocation2], %s116
        // Predicated region
        $region25: #{tpu_custom_call.1} parent=23 // pred_check
          %p118 = pneg %p39
        $region26: #{tpu_custom_call.1} parent=23 // pred_check_branch
          %120 = sbr.rel (%p118) target = $region28
        $region27: #{tpu_custom_call.1} parent=23 // pred_region
          %121 = dma.done %s114, 512
        $region28: #{tpu_custom_call.1} parent=23 // pred_fallthru
          _
        %s122 = sand.u32 %s26, 1
        %s123 = scalar_lea.sflag [#allocation3], %s122
        %s124 = sand.u32 %s26, 1
        %s125 = smul.addr %s124, 32
        %s126 = scalar_lea.vmem [#allocation2], %s125
        %p127 = pneg %p39
        %p128 = pneg %p36
        %p129 = pneg %p65
        %p130 = pneg %p62
        %s131 = sand.u32 %s52, 1
        %s132 = scalar_lea.sflag [#allocation4], %s131
        %s133 = sand.u32 %s52, 1
        %s134 = smul.addr %s133, 512
        %s135 = scalar_lea.vmem [#allocation5], %s134
        %s136 = smul.u32 2, %s18
        %s137 = smul.u32 2, %s18
        %v138 = vld [vmem:[%s117] sm:$0xff]
        %v139 = vld [vmem:[%s117 + $0x8] sm:$0xff]
        %v140 = vld [vmem:[%s117 + $0x10] sm:$0xff]
        %v141 = vld [vmem:[%s117 + $0x18] sm:$0xff]
        %146 = vrot.lane.b32.xlu0 %v138, 1
        %v147 = vpop.permute.xlu0 %146
        %148 = vrot.lane.b32.xlu0 %v139, 1
        %v149 = vpop.permute.xlu0 %148
        %150 = vrot.lane.b32.xlu0 %v140, 1
        %v151 = vpop.permute.xlu0 %150
        %152 = vrot.lane.b32.xlu0 %v141, 1
        %v153 = vpop.permute.xlu0 %152
        %vm158 = vcmask 7168
        %v159 = vsel %vm158, %v138, %v147
        %v160 = vsel %vm158, %v139, %v149
        %v161 = vsel %vm158, %v140, %v151
        %v162 = vsel %vm158, %v141, %v153
        %163 = vrot.lane.b32.xlu0 %v138, 127
        %v164 = vpop.permute.xlu0 %163
        %165 = vrot.lane.b32.xlu0 %v139, 127
        %v166 = vpop.permute.xlu0 %165
        %167 = vrot.lane.b32.xlu0 %v140, 127
        %v168 = vpop.permute.xlu0 %167
        %169 = vrot.lane.b32.xlu0 %v141, 127
        %v170 = vpop.permute.xlu0 %169
        %vm175 = vcmask 121856
        %v176 = vsel %vm175, %v164, %v138
        %v177 = vsel %vm175, %v166, %v139
        %v178 = vsel %vm175, %v168, %v140
        %v179 = vsel %vm175, %v170, %v141
        %vm184 = vcmask 1040384
        %v185 = vrot.slane %v159, 7
        %v186 = vrot.slane %v160, 7
        %v187 = vsel %vm184, %v185, %v186
        %v188 = vrot.slane %v161, 7
        %v189 = vrot.slane %v162, 7
        %v190 = vsel %vm184, %v188, %v189
        %v195 = vsel %vm184, %v159, %v185
        %v196 = vsel %vm184, %v161, %v188
        %v197 = vsub.f32 %v138, %v195
        %v198 = vsub.f32 %v139, %v187
        %v199 = vsub.f32 %v140, %v196
        %v200 = vsub.f32 %v141, %v190
        %vm201 = vcmask 130048
        %202 = vst.msk [vmem:[%s135] sm:$0xff] %vm201, %v197
        %203 = vst.msk [vmem:[%s135 + $0x8] sm:$0xff] %vm201, %v198
        %204 = vst.msk [vmem:[%s135 + $0x100] sm:$0xff] %vm201, %v199
        %205 = vst.msk [vmem:[%s135 + $0x108] sm:$0xff] %vm201, %v200
        %v206 = vrot.slane %v138, 7
        %v207 = vrot.slane %v139, 7
        %v208 = vsel %vm184, %v206, %v207
        %v209 = vrot.slane %v140, 7
        %v210 = vrot.slane %v141, 7
        %v211 = vsel %vm184, %v209, %v210
        %v216 = vsel %vm184, %v138, %v206
        %v217 = vsel %vm184, %v140, %v209
        %v218 = vsub.f32 %v138, %v216
        %v219 = vsub.f32 %v139, %v208
        %v220 = vsub.f32 %v140, %v217
        %v221 = vsub.f32 %v141, %v211
        %s222 = scalar_lea.vmem %s135, 16 [#allocation5]
        %223 = vst.msk [vmem:[%s222] sm:$0xff] %vm201, %v218
        %224 = vst.msk [vmem:[%s222 + $0x8] sm:$0xff] %vm201, %v219
        %225 = vst.msk [vmem:[%s222 + $0x100] sm:$0xff] %vm201, %v220
        %226 = vst.msk [vmem:[%s222 + $0x108] sm:$0xff] %vm201, %v221
        %v231 = vrot.slane %v176, 7
        %v232 = vrot.slane %v177, 7
        %v233 = vsel %vm184, %v231, %v232
        %v234 = vrot.slane %v178, 7
        %v235 = vrot.slane %v179, 7
        %v236 = vsel %vm184, %v234, %v235
        %v241 = vsel %vm184, %v176, %v231
        %v242 = vsel %vm184, %v178, %v234
        %v243 = vsub.f32 %v138, %v241
        %v244 = vsub.f32 %v139, %v233
        %v245 = vsub.f32 %v140, %v242
        %v246 = vsub.f32 %v141, %v236
        %s247 = scalar_lea.vmem %s135, 32 [#allocation5]
        %248 = vst.msk [vmem:[%s247] sm:$0xff] %vm201, %v243
        %249 = vst.msk [vmem:[%s247 + $0x8] sm:$0xff] %vm201, %v244
        %250 = vst.msk [vmem:[%s247 + $0x100] sm:$0xff] %vm201, %v245
        %251 = vst.msk [vmem:[%s247 + $0x108] sm:$0xff] %vm201, %v246
        %v252 = vsub.f32 %v138, %v159
        %v253 = vsub.f32 %v139, %v160
        %v254 = vsub.f32 %v140, %v161
        %v255 = vsub.f32 %v141, %v162
        %s256 = scalar_lea.vmem %s135, 48 [#allocation5]
        %257 = vst.msk [vmem:[%s256] sm:$0xff] %vm201, %v252
        %258 = vst.msk [vmem:[%s256 + $0x8] sm:$0xff] %vm201, %v253
        %259 = vst.msk [vmem:[%s256 + $0x100] sm:$0xff] %vm201, %v254
        %260 = vst.msk [vmem:[%s256 + $0x108] sm:$0xff] %vm201, %v255
        %v261 = vsub.f32 %v138, %v176
        %v262 = vsub.f32 %v139, %v177
        %v263 = vsub.f32 %v140, %v178
        %v264 = vsub.f32 %v141, %v179
        %s265 = scalar_lea.vmem %s135, 64 [#allocation5]
        %266 = vst.msk [vmem:[%s265] sm:$0xff] %vm201, %v261
        %267 = vst.msk [vmem:[%s265 + $0x8] sm:$0xff] %vm201, %v262
        %268 = vst.msk [vmem:[%s265 + $0x100] sm:$0xff] %vm201, %v263
        %269 = vst.msk [vmem:[%s265 + $0x108] sm:$0xff] %vm201, %v264
        %vm270 = vcmask 1046528
        %v271 = vrot.slane %v159, 1
        %v272 = vrot.slane %v160, 1
        %v273 = vsel %vm270, %v271, %v272
        %v274 = vrot.slane %v161, 1
        %v275 = vrot.slane %v162, 1
        %v276 = vsel %vm270, %v274, %v275
        %v281 = vsel %vm270, %v272, %v160
        %v282 = vsel %vm270, %v275, %v162
        %v283 = vsub.f32 %v138, %v273
        %v284 = vsub.f32 %v139, %v281
        %v285 = vsub.f32 %v140, %v276
        %v286 = vsub.f32 %v141, %v282
        %s287 = scalar_lea.vmem %s135, 80 [#allocation5]
        %288 = vst.msk [vmem:[%s287] sm:$0xff] %vm201, %v283
        %289 = vst.msk [vmem:[%s287 + $0x8] sm:$0xff] %vm201, %v284
        %290 = vst.msk [vmem:[%s287 + $0x100] sm:$0xff] %vm201, %v285
        %291 = vst.msk [vmem:[%s287 + $0x108] sm:$0xff] %vm201, %v286
        %v292 = vrot.slane %v138, 1
        %v293 = vrot.slane %v139, 1
        %v294 = vsel %vm270, %v292, %v293
        %v295 = vrot.slane %v140, 1
        %v296 = vrot.slane %v141, 1
        %v297 = vsel %vm270, %v295, %v296
        %v302 = vsel %vm270, %v293, %v139
        %v303 = vsel %vm270, %v296, %v141
        %v304 = vsub.f32 %v138, %v294
        %v305 = vsub.f32 %v139, %v302
        %v306 = vsub.f32 %v140, %v297
        %v307 = vsub.f32 %v141, %v303
        %s308 = scalar_lea.vmem %s135, 96 [#allocation5]
        %309 = vst.msk [vmem:[%s308] sm:$0xff] %vm201, %v304
        %310 = vst.msk [vmem:[%s308 + $0x8] sm:$0xff] %vm201, %v305
        %311 = vst.msk [vmem:[%s308 + $0x100] sm:$0xff] %vm201, %v306
        %312 = vst.msk [vmem:[%s308 + $0x108] sm:$0xff] %vm201, %v307
        %v313 = vrot.slane %v176, 1
        %v314 = vrot.slane %v177, 1
        %v315 = vsel %vm270, %v313, %v314
        %v316 = vrot.slane %v178, 1
        %v317 = vrot.slane %v179, 1
        %v318 = vsel %vm270, %v316, %v317
        %v323 = vsel %vm270, %v314, %v177
        %v324 = vsel %vm270, %v317, %v179
        %v325 = vsub.f32 %v138, %v315
        %v326 = vsub.f32 %v139, %v323
        %v327 = vsub.f32 %v140, %v318
        %v328 = vsub.f32 %v141, %v324
        %s329 = scalar_lea.vmem %s135, 112 [#allocation5]
        %330 = vst.msk [vmem:[%s329] sm:$0xff] %vm201, %v325
        %331 = vst.msk [vmem:[%s329 + $0x8] sm:$0xff] %vm201, %v326
        %332 = vst.msk [vmem:[%s329 + $0x100] sm:$0xff] %vm201, %v327
        %333 = vst.msk [vmem:[%s329 + $0x108] sm:$0xff] %vm201, %v328
        %334 = vrot.lane.b32.xlu0 %v138, 2
        %v335 = vpop.permute.xlu0 %334
        %336 = vrot.lane.b32.xlu0 %v139, 2
        %v337 = vpop.permute.xlu0 %336
        %338 = vrot.lane.b32.xlu0 %v140, 2
        %v339 = vpop.permute.xlu0 %338
        %340 = vrot.lane.b32.xlu0 %v141, 2
        %v341 = vpop.permute.xlu0 %340
        %vm346 = vcmask 15360
        %v347 = vsel %vm346, %v159, %v335
        %v348 = vsel %vm346, %v160, %v337
        %v349 = vsel %vm346, %v161, %v339
        %v350 = vsel %vm346, %v162, %v341
        %351 = vrot.lane.b32.xlu0 %v138, 126
        %v352 = vpop.permute.xlu0 %351
        %353 = vrot.lane.b32.xlu0 %v139, 126
        %v354 = vpop.permute.xlu0 %353
        %355 = vrot.lane.b32.xlu0 %v140, 126
        %v356 = vpop.permute.xlu0 %355
        %357 = vrot.lane.b32.xlu0 %v141, 126
        %v358 = vpop.permute.xlu0 %357
        %vm363 = vcmask 113664
        %v364 = vsel %vm363, %v352, %v164
        %v365 = vsel %vm363, %v354, %v166
        %v366 = vsel %vm363, %v356, %v168
        %v367 = vsel %vm363, %v358, %v170
        %v368 = vsel %vm175, %v364, %v138
        %v369 = vsel %vm175, %v365, %v139
        %v370 = vsel %vm175, %v366, %v140
        %v371 = vsel %vm175, %v367, %v141
        %v374 = vrot.slane %v347, 7
        %v375 = vrot.slane %v349, 7
        %vm380 = vcmask 1041408
        %v381 = vrot.slane %v347, 6
        %v382 = vrot.slane %v348, 6
        %v383 = vsel %vm380, %v381, %v382
        %v384 = vrot.slane %v349, 6
        %v385 = vrot.slane %v350, 6
        %v386 = vsel %vm380, %v384, %v385
        %v391 = vsel %vm184, %v347, %v374
        %v392 = vsel %vm184, %v349, %v375
        %v393 = vsel %vm380, %v391, %v381
        %v394 = vsel %vm380, %v392, %v384
        %v395 = vsub.f32 %v138, %v393
        %v396 = vsub.f32 %v139, %v383
        %v397 = vsub.f32 %v140, %v394
        %v398 = vsub.f32 %v141, %v386
        %s399 = scalar_lea.vmem %s135, 128 [#allocation5]
        %400 = vst.msk [vmem:[%s399] sm:$0xff] %vm201, %v395
        %401 = vst.msk [vmem:[%s399 + $0x8] sm:$0xff] %vm201, %v396
        %402 = vst.msk [vmem:[%s399 + $0x100] sm:$0xff] %vm201, %v397
        %403 = vst.msk [vmem:[%s399 + $0x108] sm:$0xff] %vm201, %v398
        %v404 = vrot.slane %v138, 6
        %v405 = vrot.slane %v139, 6
        %v406 = vsel %vm380, %v404, %v405
        %v407 = vrot.slane %v140, 6
        %v408 = vrot.slane %v141, 6
        %v409 = vsel %vm380, %v407, %v408
        %v414 = vsel %vm380, %v216, %v404
        %v415 = vsel %vm380, %v217, %v407
        %v416 = vsub.f32 %v138, %v414
        %v417 = vsub.f32 %v139, %v406
        %v418 = vsub.f32 %v140, %v415
        %v419 = vsub.f32 %v141, %v409
        %s420 = scalar_lea.vmem %s135, 144 [#allocation5]
        %421 = vst.msk [vmem:[%s420] sm:$0xff] %vm201, %v416
        %422 = vst.msk [vmem:[%s420 + $0x8] sm:$0xff] %vm201, %v417
        %423 = vst.msk [vmem:[%s420 + $0x100] sm:$0xff] %vm201, %v418
        %424 = vst.msk [vmem:[%s420 + $0x108] sm:$0xff] %vm201, %v419
        %v427 = vrot.slane %v368, 7
        %v428 = vrot.slane %v370, 7
        %v433 = vrot.slane %v368, 6
        %v434 = vrot.slane %v369, 6
        %v435 = vsel %vm380, %v433, %v434
        %v436 = vrot.slane %v370, 6
        %v437 = vrot.slane %v371, 6
        %v438 = vsel %vm380, %v436, %v437
        %v443 = vsel %vm184, %v368, %v427
        %v444 = vsel %vm184, %v370, %v428
        %v445 = vsel %vm380, %v443, %v433
        %v446 = vsel %vm380, %v444, %v436
        %v447 = vsub.f32 %v138, %v445
        %v448 = vsub.f32 %v139, %v435
        %v449 = vsub.f32 %v140, %v446
        %v450 = vsub.f32 %v141, %v438
        %s451 = scalar_lea.vmem %s135, 160 [#allocation5]
        %452 = vst.msk [vmem:[%s451] sm:$0xff] %vm201, %v447
        %453 = vst.msk [vmem:[%s451 + $0x8] sm:$0xff] %vm201, %v448
        %454 = vst.msk [vmem:[%s451 + $0x100] sm:$0xff] %vm201, %v449
        %455 = vst.msk [vmem:[%s451 + $0x108] sm:$0xff] %vm201, %v450
        %v456 = vsub.f32 %v138, %v347
        %v457 = vsub.f32 %v139, %v348
        %v458 = vsub.f32 %v140, %v349
        %v459 = vsub.f32 %v141, %v350
        %s460 = scalar_lea.vmem %s135, 176 [#allocation5]
        %461 = vst.msk [vmem:[%s460] sm:$0xff] %vm201, %v456
        %462 = vst.msk [vmem:[%s460 + $0x8] sm:$0xff] %vm201, %v457
        %463 = vst.msk [vmem:[%s460 + $0x100] sm:$0xff] %vm201, %v458
        %464 = vst.msk [vmem:[%s460 + $0x108] sm:$0xff] %vm201, %v459
        %v465 = vsub.f32 %v138, %v368
        %v466 = vsub.f32 %v139, %v369
        %v467 = vsub.f32 %v140, %v370
        %v468 = vsub.f32 %v141, %v371
        %s469 = scalar_lea.vmem %s135, 192 [#allocation5]
        %470 = vst.msk [vmem:[%s469] sm:$0xff] %vm201, %v465
        %471 = vst.msk [vmem:[%s469 + $0x8] sm:$0xff] %vm201, %v466
        %472 = vst.msk [vmem:[%s469 + $0x100] sm:$0xff] %vm201, %v467
        %473 = vst.msk [vmem:[%s469 + $0x108] sm:$0xff] %vm201, %v468
        %vm474 = vcmask 1045504
        %v475 = vrot.slane %v347, 2
        %v476 = vrot.slane %v348, 2
        %v477 = vsel %vm474, %v475, %v476
        %v478 = vrot.slane %v349, 2
        %v479 = vrot.slane %v350, 2
        %v480 = vsel %vm474, %v478, %v479
        %v485 = vrot.slane %v348, 1
        %v486 = vrot.slane %v350, 1
        %v489 = vsel %vm474, %v476, %v485
        %v490 = vsel %vm474, %v479, %v486
        %v491 = vsel %vm270, %v489, %v348
        %v492 = vsel %vm270, %v490, %v350
        %v493 = vsub.f32 %v138, %v477
        %v494 = vsub.f32 %v139, %v491
        %v495 = vsub.f32 %v140, %v480
        %v496 = vsub.f32 %v141, %v492
        %s497 = scalar_lea.vmem %s135, 208 [#allocation5]
        %498 = vst.msk [vmem:[%s497] sm:$0xff] %vm201, %v493
        %499 = vst.msk [vmem:[%s497 + $0x8] sm:$0xff] %vm201, %v494
        %500 = vst.msk [vmem:[%s497 + $0x100] sm:$0xff] %vm201, %v495
        %501 = vst.msk [vmem:[%s497 + $0x108] sm:$0xff] %vm201, %v496
        %v502 = vrot.slane %v138, 2
        %v503 = vrot.slane %v139, 2
        %v504 = vsel %vm474, %v502, %v503
        %v505 = vrot.slane %v140, 2
        %v506 = vrot.slane %v141, 2
        %v507 = vsel %vm474, %v505, %v506
        %v512 = vsel %vm474, %v503, %v293
        %v513 = vsel %vm474, %v506, %v296
        %v514 = vsel %vm270, %v512, %v139
        %v515 = vsel %vm270, %v513, %v141
        %v516 = vsub.f32 %v138, %v504
        %v517 = vsub.f32 %v139, %v514
        %v518 = vsub.f32 %v140, %v507
        %v519 = vsub.f32 %v141, %v515
        %s520 = scalar_lea.vmem %s135, 224 [#allocation5]
        %521 = vst.msk [vmem:[%s520] sm:$0xff] %vm201, %v516
        %522 = vst.msk [vmem:[%s520 + $0x8] sm:$0xff] %vm201, %v517
        %523 = vst.msk [vmem:[%s520 + $0x100] sm:$0xff] %vm201, %v518
        %524 = vst.msk [vmem:[%s520 + $0x108] sm:$0xff] %vm201, %v519
        %v525 = vrot.slane %v368, 2
        %v526 = vrot.slane %v369, 2
        %v527 = vsel %vm474, %v525, %v526
        %v528 = vrot.slane %v370, 2
        %v529 = vrot.slane %v371, 2
        %v530 = vsel %vm474, %v528, %v529
        %v535 = vrot.slane %v369, 1
        %v536 = vrot.slane %v371, 1
        %v539 = vsel %vm474, %v526, %v535
        %v540 = vsel %vm474, %v529, %v536
        %v541 = vsel %vm270, %v539, %v369
        %v542 = vsel %vm270, %v540, %v371
        %v543 = vsub.f32 %v138, %v527
        %v544 = vsub.f32 %v139, %v541
        %v545 = vsub.f32 %v140, %v530
        %v546 = vsub.f32 %v141, %v542
        %s547 = scalar_lea.vmem %s135, 240 [#allocation5]
        %548 = vst.msk [vmem:[%s547] sm:$0xff] %vm201, %v543
        %549 = vst.msk [vmem:[%s547 + $0x8] sm:$0xff] %vm201, %v544
        %550 = vst.msk [vmem:[%s547 + $0x100] sm:$0xff] %vm201, %v545
        %551 = vst.msk [vmem:[%s547 + $0x108] sm:$0xff] %vm201, %v546
        %s552 = sand.u32 %s52, 1
        %s553 = scalar_lea.sflag [#allocation4], %s552
        %s554 = sand.u32 %s52, 1
        %s555 = smul.addr %s554, 512
        %s556 = scalar_lea.vmem [#allocation5], %s555
        // Predicated region
        $region29: #{tpu_custom_call.1} parent=23 // pred_check
          %p557 = pneg %p62
        $region30: #{tpu_custom_call.1} parent=23 // pred_check_branch
          %559 = sbr.rel (%p557) target = $region32
        $region31: #{tpu_custom_call.1} parent=23 // pred_region
          %s560 = smul.u32 2, %s18
          %s562 = ssub.s32 8192, 8192
          %563 = vsyncadd %s553, %s562
          %s564 = smul.addr %s560, 32
          %s565 = smul.addr %s564, 128
          %s566 = scalar_lea.hbm %s1, %s565
          %s567 = sshll.u32 %s556, 4
          %s568 = int_to_ptr.vmem [resolvable:$true] %s567
          %573 = dma.vmem_to_hbm [thread:$0]  %s568, 8192, %s566, %s553, 128, 128, 8
        $region32: #{tpu_custom_call.1} parent=23 // pred_fallthru
          _
      $region24: #{tpu_custom_call.1} parent=5 // pred_fallthru
        _
      %p574 = scmp.le.s32.totalorder 2, %s13
      // Predicated region
      $region33: #{tpu_custom_call.1} parent=5 // pred_check
        %p575 = pneg %p574
      $region34: #{tpu_custom_call.1} parent=5 // pred_check_branch
        %577 = sbr.rel (%p575) target = $region36
      $region35: #{tpu_custom_call.1} parent=5 // pred_region
        %s578 = ssub.s32 %s13, 2
        // Predicated region
        $region37: #{tpu_custom_call.1} parent=35 // pred_check
          %p579 = pneg %p68
        $region38: #{tpu_custom_call.1} parent=35 // pred_check_branch
          %581 = sbr.rel (%p579) target = $region40
        $region39: #{tpu_custom_call.1} parent=35 // pred_region
          %s582 = sand.u32 %s53, 1
          %s583 = scalar_lea.sflag [#allocation4], %s582
          %s584 = sand.u32 %s53, 1
          %s585 = smul.addr %s584, 512
          %s586 = scalar_lea.vmem [#allocation5], %s585
          %587 = dma.done %s583, 8192
        $region40: #{tpu_custom_call.1} parent=35 // pred_fallthru
          _
      $region36: #{tpu_custom_call.1} parent=5 // pred_fallthru
        _
    $region6: #{tpu_custom_call.1} parent=1 // loop_footer
      %s17 = sadd.s32 1, %s13
    $region7: #{tpu_custom_call.1} parent=1 // loop_footer_branch
      %12 = sbr.rel target = $region3
    $region8: #{tpu_custom_call.1} parent=1 // loop_exit
      _
    %588 = vsyncpa [#allocation3], 1
    %s589 = scalar_lea.sflag [#allocation3], 1
    %590 = vsyncpa %s589, 1
    %591 = vsyncpa [#allocation4], 1
    %s592 = scalar_lea.sflag [#allocation4], 1
    %593 = vsyncpa %s592, 1

</llo_original>
